<compile_context>
chip_gen: v6e
topology: v6e:2x2x1
jax: 0.10.0
libtpu: 0.0.40
codegen_flags: <defaults>
</compile_context>

<pallas_src>
import functools

import jax
import jax.numpy as jnp
import numpy as np
from jax.experimental import pallas as pl
from jax.experimental.pallas import tpu as pltpu


def _tversky_partials_kernel(*refs, C, TN, N, inner, has_mask, need_valid):
    """Grid point = (batch b, spatial split s, spatial tile n).

    Blocks:
      logits: (1, C, TN)  float (cast to f32 in-kernel)
      target: (1, 1, TN)  int32
      mask:   (1, 1, TN)  f32   (only when has_mask)
      out:    (1, 3, C, TN) f32 lane-partial accumulator, resident over n:
              [0] = sum probs*onehot*msk^2   (tp, exactly as the reference)
              [1] = sum probs*msk            (fp = [1] - [0])
              [2] = sum onehot*msk           (fn = [2] - [0])
    """
    if has_mask:
        logits_ref, target_ref, mask_ref, out_ref = refs
    else:
        logits_ref, target_ref, out_ref = refs
        mask_ref = None

    n_idx = pl.program_id(2)

    @pl.when(n_idx == 0)
    def _():
        out_ref[...] = jnp.zeros_like(out_ref)

    logits = logits_ref[0].astype(jnp.float32)            # (C, TN)
    tgt = target_ref[0]                                   # (1, TN) int32

    valid = None
    if need_valid:
        g = pl.program_id(1) * inner + n_idx              # global spatial tile
        lane = jax.lax.broadcasted_iota(jnp.int32, (1, TN), 1)
        valid = (g * TN + lane) < N                       # (1, TN) bool
        logits = jnp.where(valid, logits, 0.0)            # sanitize ragged lanes

    # numerically-stable softmax over the channel (sublane) axis
    m = jnp.max(logits, axis=0, keepdims=True)            # (1, TN)
    e = jnp.exp(logits - m)                               # (C, TN)  (EUP)
    denom = jnp.sum(e, axis=0, keepdims=True)             # (1, TN)
    inv = pl.reciprocal(denom, approx=False)              # divide only one row
    probs = e * inv                                       # (C, TN)

    ch = jax.lax.broadcasted_iota(jnp.int32, (C, TN), 0)
    is_hot = ch == tgt                                    # (C, TN) bool

    msk = None
    if has_mask:
        msk = mask_ref[0].astype(jnp.float32)             # (1, TN)
        if need_valid:
            msk = jnp.where(valid, msk, 0.0)
    elif need_valid:
        msk = valid.astype(jnp.float32)

    if msk is not None:
        p_m = probs * msk                                 # probs * msk
        oh_m = jnp.where(is_hot, msk, 0.0)                # onehot * msk
        tp_elem = p_m * oh_m                              # probs * onehot * msk^2
    else:
        p_m = probs
        oh_m = is_hot.astype(jnp.float32)
        tp_elem = jnp.where(is_hot, probs, 0.0)

    out_ref[0, 0] += tp_elem
    out_ref[0, 1] += p_m
    out_ref[0, 2] += oh_m


def _round_up(x, m):
    return ((x + m - 1) // m) * m


@functools.partial(jax.jit,
                   static_argnames=("alpha", "beta", "gamma", "smooth", "tn"))
def focal_tversky_loss(logits, target, loss_mask=None, *,
                       alpha=0.5, beta=0.5, gamma=0.75, smooth=1e-6, tn=4096):
    """logits: [B, C, D, H, W]; target: [B, D, H, W] or [B, 1, D, H, W]."""
    if target.ndim == 5 and target.shape[1] == 1:
        target = jnp.squeeze(target, axis=1)
    target = target.astype(jnp.int32)

    B, C = logits.shape[:2]
    N = int(np.prod(logits.shape[2:]))

    logits3 = logits.reshape(B, C, N)        # keep caller dtype (bf16 ok)
    target3 = target.reshape(B, 1, N)

    has_mask = loss_mask is not None
    if has_mask:
        if loss_mask.ndim == 5 and loss_mask.shape[1] == 1:
            loss_mask = jnp.squeeze(loss_mask, axis=1)
        mask3 = loss_mask.reshape(B, 1, N).astype(jnp.float32)

    # Large spatial tile (multiple of 128), no HBM padding: ragged last tile
    # is masked in-kernel.
    TN = min(_round_up(tn, 128), _round_up(N, 128))
    num_tiles = pl.cdiv(N, TN)

    # Give both v7x TensorCores work when the batch axis alone can't.
    nsplit = 2 if B < 2 else 1
    inner = pl.cdiv(num_tiles, nsplit)
    need_valid = (N % TN != 0) or (inner * nsplit != num_tiles)
    last_tile = num_tiles - 1

    def data_map(b, s, n):
        # clamp duplicate tiles (when nsplit doesn't divide num_tiles); their
        # contribution is zeroed in-kernel by the validity mask.
        return (b, 0, jnp.minimum(s * inner + n, last_tile))

    in_specs = [
        pl.BlockSpec((1, C, TN), data_map),
        pl.BlockSpec((1, 1, TN), data_map),
    ]
    args = [logits3, target3]
    if has_mask:
        in_specs.append(pl.BlockSpec((1, 1, TN), data_map))
        args.append(mask3)

    kernel = functools.partial(
        _tversky_partials_kernel, C=C, TN=TN, N=N, inner=inner,
        has_mask=has_mask, need_valid=need_valid)

    partials = pl.pallas_call(
        kernel,
        out_shape=jax.ShapeDtypeStruct((B * nsplit, 3, C, TN), jnp.float32),
        grid_spec=pltpu.PrefetchScalarGridSpec(
            num_scalar_prefetch=0,
            grid=(B, nsplit, inner),
            in_specs=in_specs,
            out_specs=pl.BlockSpec(
                (1, 3, C, TN), lambda b, s, n: (b * nsplit + s, 0, 0, 0)),
        ),
        compiler_params=pltpu.CompilerParams(
            dimension_semantics=("parallel", "parallel", "arbitrary")),
    )(*args)

    # Tiny finalization in plain JAX: lane sums + Tversky / focal / mean.
    stats = partials.sum(axis=-1).reshape(B, nsplit, 3, C).sum(axis=1)  # (B,3,C)
    tp = stats[:, 0]
    fp = stats[:, 1] - tp
    fn = stats[:, 2] - tp
    tversky = (tp + smooth) / (tp + alpha * fp + beta * fn + smooth)
    focal_tversky = (1.0 - tversky) ** gamma
    return jnp.mean(focal_tversky)


def _reference_loss(logits, target, loss_mask=None,
                    alpha=0.5, beta=0.5, gamma=0.75, smooth=1e-6):
    """Pure-JAX reference mirroring the PyTorch module."""
    B, C = logits.shape[:2]
    probs = jax.nn.softmax(logits.astype(jnp.float32), axis=1)
    probs_flat = probs.reshape(B, C, -1)
    tgt = target
    if tgt.ndim == 5 and tgt.shape[1] == 1:
        tgt = tgt[:, 0]
    tgt_flat = tgt.reshape(B, -1).astype(jnp.int32)
    one_hot = jax.nn.one_hot(tgt_flat, C, axis=1, dtype=jnp.float32)
    if loss_mask is not None:
        lm = loss_mask
        if lm.ndim == 5 and lm.shape[1] == 1:
            lm = lm[:, 0]
        lm = lm.reshape(B, 1, -1).astype(jnp.float32)
        one_hot = one_hot * lm
        probs_flat = probs_flat * lm
    tp = jnp.sum(probs_flat * one_hot, axis=2)
    fp = jnp.sum(probs_flat * (1.0 - one_hot), axis=2)
    fn = jnp.sum((1.0 - probs_flat) * one_hot, axis=2)
    tversky = (tp + smooth) / (tp + alpha * fp + beta * fn + smooth)
    return jnp.mean((1.0 - tversky) ** gamma)


if __name__ == "__main__":
    key = jax.random.PRNGKey(0)
    k1, k2, k3, k4, k5 = jax.random.split(key, 5)

    # Case 1: no mask, ragged single tile (N = 240).
    B, C, D, H, W = 2, 4, 4, 6, 10
    logits = jax.random.normal(k1, (B, C, D, H, W), dtype=jnp.float32)
    target = jax.random.randint(k2, (B, 1, D, H, W), 0, C, dtype=jnp.int32)
    loss = jax.block_until_ready(focal_tversky_loss(logits, target))
    ref = _reference_loss(logits, target)
    np.testing.assert_allclose(np.asarray(loss), np.asarray(ref),
                               rtol=1e-4, atol=1e-6)

    # Case 2: binary loss mask, multi-tile accumulation + ragged last tile.
    mask = (jax.random.uniform(k3, (B, 1, D, H, W)) > 0.3).astype(jnp.float32)
    loss2 = jax.block_until_ready(focal_tversky_loss(logits, target, mask, tn=128))
    ref2 = _reference_loss(logits, target, mask)
    np.testing.assert_allclose(np.asarray(loss2), np.asarray(ref2),
                               rtol=1e-4, atol=1e-6)

    # Case 3: exact tiling (N = 256, tn = 128) -> fast no-mask path, 2 tiles.
    logits3 = jax.random.normal(k4, (B, C, 4, 8, 8), dtype=jnp.float32)
    target3 = jax.random.randint(k5, (B, 1, 4, 8, 8), 0, C, dtype=jnp.int32)
    loss3 = jax.block_until_ready(focal_tversky_loss(logits3, target3, tn=128))
    ref3 = _reference_loss(logits3, target3)
    np.testing.assert_allclose(np.asarray(loss3), np.asarray(ref3),
                               rtol=1e-4, atol=1e-6)

    # Case 4: B == 1 -> spatial axis split across 2 "parallel" slots (v7x),
    # odd tile count exercises the clamped/masked duplicate-tile path.
    logits4 = jax.random.normal(k1, (1, C, 3, 10, 10), dtype=jnp.float32)
    target4 = jax.random.randint(k2, (1, 1, 3, 10, 10), 0, C, dtype=jnp.int32)
    loss4 = jax.block_until_ready(focal_tversky_loss(logits4, target4, tn=128))
    ref4 = _reference_loss(logits4, target4)
    np.testing.assert_allclose(np.asarray(loss4), np.asarray(ref4),
                               rtol=1e-4, atol=1e-6)

    print("KERNEL_OK")
</pallas_src>

<mosaic_0001>
module attributes {stable_mosaic.version = 11 : i64} {
  func.func @_tversky_partials_kernel(%arg0: i32, %arg1: i32, %arg2: i32, %arg3: memref<1x4x256xf32, #tpu.memory_space<vmem>>, %arg4: memref<1x1x256xi32, #tpu.memory_space<vmem>>, %arg5: memref<1x3x4x256xf32, #tpu.memory_space<vmem>>) attributes {dimension_semantics = [#tpu.dimension_semantics<parallel>, #tpu.dimension_semantics<parallel>, #tpu.dimension_semantics<arbitrary>], iteration_bounds = array<i64: 2, 1, 1>, scalar_prefetch = 0 : i64, scratch_operands = 0 : i64, tpu.core_type = #tpu.core_type<tc>, window_params = [{transform_indices = @transform_0, window_bounds = array<i64: 1, 4, 256>}, {transform_indices = @transform_1, window_bounds = array<i64: 1, 1, 256>}, {transform_indices = @transform_2, window_bounds = array<i64: 1, 3, 4, 256>}]} {
    %c0_i32 = arith.constant 0 : i32
    %0 = arith.cmpi eq, %arg2, %c0_i32 : i32
    %1 = arith.extui %0 : i1 to i32
    %c0_i32_0 = arith.constant 0 : i32
    %2 = arith.cmpi ne, %1, %c0_i32_0 : i32
    scf.if %2 {
      %cst_31 = arith.constant 0.000000e+00 : f32
      %59 = vector.broadcast %cst_31 : f32 to vector<1x3x4x256xf32>
      %c0_32 = arith.constant 0 : index
      %c0_33 = arith.constant 0 : index
      %c0_34 = arith.constant 0 : index
      %c0_35 = arith.constant 0 : index
      %60 = vector.load %arg5[%c0_32, %c0_33, %c0_34, %c0_35] : memref<1x3x4x256xf32, #tpu.memory_space<vmem>>, vector<1x3x4x256xf32>
      tpu.vector_store %arg5[%c0_32, %c0_33, %c0_34, %c0_35], %59 {strides = array<i32>} : memref<1x3x4x256xf32, #tpu.memory_space<vmem>>, vector<1x3x4x256xf32>,
    } else {
    }
    %c0 = arith.constant 0 : index
    %c0_1 = arith.constant 0 : index
    %c0_2 = arith.constant 0 : index
    %3 = vector.load %arg3[%c0, %c0_1, %c0_2] : memref<1x4x256xf32, #tpu.memory_space<vmem>>, vector<1x4x256xf32>
    %4 = vector.shape_cast %3 : vector<1x4x256xf32> to vector<4x256xf32>
    %c0_3 = arith.constant 0 : index
    %c0_4 = arith.constant 0 : index
    %c0_5 = arith.constant 0 : index
    %5 = vector.load %arg4[%c0_3, %c0_4, %c0_5] : memref<1x1x256xi32, #tpu.memory_space<vmem>>, vector<1x1x256xi32>
    %6 = vector.shape_cast %5 : vector<1x1x256xi32> to vector<1x256xi32>
    %c1_i32 = arith.constant 1 : i32
    %7 = arith.muli %arg1, %c1_i32 : i32
    %8 = arith.addi %7, %arg2 : i32
    %9 = tpu.iota {dimensions = array<i32: 1>} : vector<1x256xi32>
    %c256_i32 = arith.constant 256 : i32
    %10 = arith.muli %8, %c256_i32 : i32
    %11 = vector.broadcast %10 : i32 to vector<1x256xi32>
    %12 = arith.addi %11, %9 : vector<1x256xi32>
    %c240_i32 = arith.constant 240 : i32
    %13 = vector.broadcast %c240_i32 : i32 to vector<1x256xi32>
    %14 = arith.cmpi slt, %12, %13 : vector<1x256xi32>
    %cst = arith.constant 0.000000e+00 : f32
    %15 = vector.shape_cast %14 : vector<1x256xi1> to vector<1x256xi1>
    %16 = vector.broadcast %15 : vector<1x256xi1> to vector<4x256xi1>
    %17 = vector.broadcast %cst : f32 to vector<4x256xf32>
    %18 = arith.select %16, %4, %17 : vector<4x256xi1>, vector<4x256xf32>
    %cst_6 = arith.constant dense<0xFF800000> : vector<256xf32>
    %19 = vector.multi_reduction <maximumf>, %18, %cst_6 [0] : vector<4x256xf32> to vector<256xf32>
    %20 = vector.shape_cast %19 : vector<256xf32> to vector<1x256xf32>
    %21 = vector.broadcast %20 : vector<1x256xf32> to vector<4x256xf32>
    %22 = arith.subf %18, %21 : vector<4x256xf32>
    %23 = math.exp %22 : vector<4x256xf32>
    %cst_7 = arith.constant dense<0.000000e+00> : vector<256xf32>
    %24 = vector.multi_reduction <add>, %23, %cst_7 [0] : vector<4x256xf32> to vector<256xf32>
    %25 = vector.shape_cast %24 : vector<256xf32> to vector<1x256xf32>
    %26 = tpu.reciprocal %25 : vector<1x256xf32> -> vector<1x256xf32>
    %27 = vector.broadcast %26 : vector<1x256xf32> to vector<4x256xf32>
    %28 = arith.mulf %23, %27 : vector<4x256xf32>
    %29 = tpu.iota {dimensions = array<i32: 0>} : vector<4x256xi32>
    %30 = vector.broadcast %6 : vector<1x256xi32> to vector<4x256xi32>
    %31 = arith.cmpi eq, %29, %30 : vector<4x256xi32>
    %32 = arith.extui %14 : vector<1x256xi1> to vector<1x256xi32>
    %33 = arith.sitofp %32 : vector<1x256xi32> to vector<1x256xf32>
    %34 = vector.broadcast %33 : vector<1x256xf32> to vector<4x256xf32>
    %35 = arith.mulf %28, %34 : vector<4x256xf32>
    %cst_8 = arith.constant 0.000000e+00 : f32
    %36 = vector.shape_cast %33 : vector<1x256xf32> to vector<1x256xf32>
    %37 = vector.broadcast %36 : vector<1x256xf32> to vector<4x256xf32>
    %38 = vector.broadcast %cst_8 : f32 to vector<4x256xf32>
    %39 = arith.select %31, %37, %38 : vector<4x256xi1>, vector<4x256xf32>
    %40 = arith.mulf %35, %39 : vector<4x256xf32>
    %c0_9 = arith.constant 0 : index
    %c0_10 = arith.constant 0 : index
    %c0_11 = arith.constant 0 : index
    %c0_12 = arith.constant 0 : index
    %41 = vector.load %arg5[%c0_9, %c0_10, %c0_11, %c0_12] : memref<1x3x4x256xf32, #tpu.memory_space<vmem>>, vector<1x1x4x256xf32>
    %42 = vector.shape_cast %41 : vector<1x1x4x256xf32> to vector<4x256xf32>
    %43 = arith.addf %42, %40 : vector<4x256xf32>
    %c0_13 = arith.constant 0 : index
    %c0_14 = arith.constant 0 : index
    %c0_15 = arith.constant 0 : index
    %c0_16 = arith.constant 0 : index
    %44 = vector.load %arg5[%c0_13, %c0_14, %c0_15, %c0_16] : memref<1x3x4x256xf32, #tpu.memory_space<vmem>>, vector<1x1x4x256xf32>
    %45 = vector.shape_cast %44 : vector<1x1x4x256xf32> to vector<4x256xf32>
    %46 = vector.shape_cast %43 : vector<4x256xf32> to vector<1x1x4x256xf32>
    tpu.vector_store %arg5[%c0_13, %c0_14, %c0_15, %c0_16], %46 {strides = array<i32>} : memref<1x3x4x256xf32, #tpu.memory_space<vmem>>, vector<1x1x4x256xf32>,
    %c0_17 = arith.constant 0 : index
    %c1 = arith.constant 1 : index
    %c0_18 = arith.constant 0 : index
    %c0_19 = arith.constant 0 : index
    %47 = vector.load %arg5[%c0_17, %c1, %c0_18, %c0_19] : memref<1x3x4x256xf32, #tpu.memory_space<vmem>>, vector<1x1x4x256xf32>
    %48 = vector.shape_cast %47 : vector<1x1x4x256xf32> to vector<4x256xf32>
    %49 = arith.addf %48, %35 : vector<4x256xf32>
    %c0_20 = arith.constant 0 : index
    %c1_21 = arith.constant 1 : index
    %c0_22 = arith.constant 0 : index
    %c0_23 = arith.constant 0 : index
    %50 = vector.load %arg5[%c0_20, %c1_21, %c0_22, %c0_23] : memref<1x3x4x256xf32, #tpu.memory_space<vmem>>, vector<1x1x4x256xf32>
    %51 = vector.shape_cast %50 : vector<1x1x4x256xf32> to vector<4x256xf32>
    %52 = vector.shape_cast %49 : vector<4x256xf32> to vector<1x1x4x256xf32>
    tpu.vector_store %arg5[%c0_20, %c1_21, %c0_22, %c0_23], %52 {strides = array<i32>} : memref<1x3x4x256xf32, #tpu.memory_space<vmem>>, vector<1x1x4x256xf32>,
    %c0_24 = arith.constant 0 : index
    %c2 = arith.constant 2 : index
    %c0_25 = arith.constant 0 : index
    %c0_26 = arith.constant 0 : index
    %53 = vector.load %arg5[%c0_24, %c2, %c0_25, %c0_26] : memref<1x3x4x256xf32, #tpu.memory_space<vmem>>, vector<1x1x4x256xf32>
    %54 = vector.shape_cast %53 : vector<1x1x4x256xf32> to vector<4x256xf32>
    %55 = arith.addf %54, %39 : vector<4x256xf32>
    %c0_27 = arith.constant 0 : index
    %c2_28 = arith.constant 2 : index
    %c0_29 = arith.constant 0 : index
    %c0_30 = arith.constant 0 : index
    %56 = vector.load %arg5[%c0_27, %c2_28, %c0_29, %c0_30] : memref<1x3x4x256xf32, #tpu.memory_space<vmem>>, vector<1x1x4x256xf32>
    %57 = vector.shape_cast %56 : vector<1x1x4x256xf32> to vector<4x256xf32>
    %58 = vector.shape_cast %55 : vector<4x256xf32> to vector<1x1x4x256xf32>
    tpu.vector_store %arg5[%c0_27, %c2_28, %c0_29, %c0_30], %58 {strides = array<i32>} : memref<1x3x4x256xf32, #tpu.memory_space<vmem>>, vector<1x1x4x256xf32>,
    return
  }
  func.func @transform_0(%arg0: i32, %arg1: i32, %arg2: i32) -> (i32, i32, i32) {
    %c1_i32 = arith.constant 1 : i32
    %0 = arith.muli %arg1, %c1_i32 : i32
    %1 = arith.addi %0, %arg2 : i32
    %c0_i32 = arith.constant 0 : i32
    %2 = arith.minsi %1, %c0_i32 : i32
    %c0_i32_0 = arith.constant 0 : i32
    %c0_i32_1 = arith.constant 0 : i32
    return %arg0, %c0_i32_0, %2 : i32, i32, i32
  }
  func.func @transform_1(%arg0: i32, %arg1: i32, %arg2: i32) -> (i32, i32, i32) {
    %c1_i32 = arith.constant 1 : i32
    %0 = arith.muli %arg1, %c1_i32 : i32
    %1 = arith.addi %0, %arg2 : i32
    %c0_i32 = arith.constant 0 : i32
    %2 = arith.minsi %1, %c0_i32 : i32
    %c0_i32_0 = arith.constant 0 : i32
    %c0_i32_1 = arith.constant 0 : i32
    return %arg0, %c0_i32_0, %2 : i32, i32, i32
  }
  func.func @transform_2(%arg0: i32, %arg1: i32, %arg2: i32) -> (i32, i32, i32, i32) {
    %c1_i32 = arith.constant 1 : i32
    %0 = arith.muli %arg0, %c1_i32 : i32
    %1 = arith.addi %0, %arg1 : i32
    %c0_i32 = arith.constant 0 : i32
    %c0_i32_0 = arith.constant 0 : i32
    %c0_i32_1 = arith.constant 0 : i32
    %c0_i32_2 = arith.constant 0 : i32
    return %1, %c0_i32, %c0_i32_0, %c0_i32_1 : i32, i32, i32, i32
  }
}

</mosaic_0001>

<llo_original>
// kernel: squeeze.0
$region0: #{squeeze.0}
  %s0 = inlined_call_operand.vmem [shape: s32[2,1,4,6,10], index: 0, kind: input, shape index: {}]
  %s1 = inlined_call_operand.vmem [shape: s32[2,1,240], index: 1, kind: output, shape index: {}]
  $region1: #{squeeze.0} parent=0
    #allocation0 [shape = 'u8[16384]{0}', space=vmem, size = 0x4000, scoped, tag = 'scoped mem for output reshape']
    %v2 = vld [vmem:[%s0] sm:$0x1]
    %s3 = scalar_lea.vmem %s0, 31
    %v4 = vld [vmem:[%s3] sm:$0x2]
    %vm5 = vcmask 1041409
    %v6 = vsel %vm5, %v4, %v2
    %vm7 = vcmask 80896
    %8 = vst.msk [vmem:[#allocation0] ss:$16 sm:$0x3] %vm7, %v6
    %s9 = scalar_lea.vmem %s0, 16
    %v10 = vld [vmem:[%s9] sm:$0x1]
    %s11 = scalar_lea.vmem %s0, 47
    %v12 = vld [vmem:[%s11] sm:$0x2]
    %vm13 = vcmask 1041409
    %v14 = vsel %vm13, %v12, %v10
    %s15 = scalar_lea.vmem %s0, 16
    %v16 = vld [vmem:[%s15] sm:$0x1]
    %s17 = scalar_lea.vmem %s0, 47
    %v18 = vld [vmem:[%s17] sm:$0x2]
    %vm19 = vcmask 1041409
    %v20 = vsel %vm19, %v18, %v16
    %vm21 = vcmask 64512
    %v22 = vsel %vm21, %v20, %v14
    %23 = vrot.lane.b32.xlu0 %v22, 120
    %v24 = vpop.permute.xlu0 %23
    %vm25 = vcmask 15360
    %s26 = scalar_lea.vmem [#allocation0], 8
    %27 = vst.msk [vmem:[%s26] ss:$16 sm:$0x3] %vm25, %v24
    %vm28 = vcmask 1048512
    %29 = vst.msk [vmem:[#allocation0] ss:$16 sm:$0x3] %vm28, %v24
    %s30 = scalar_lea.vmem %s0, 13
    %v31 = vld [vmem:[%s30] sm:$0x1]
    %s32 = scalar_lea.vmem %s0, 44
    %v33 = vld [vmem:[%s32] sm:$0x2]
    %vm34 = vcmask 1041409
    %v35 = vsel %vm34, %v33, %v31
    %36 = vrot.lane.b32.xlu0 %v35, 110
    %v37 = vpop.permute.xlu0 %36
    %vm38 = vcmask 982896
    %39 = vst.msk [vmem:[#allocation0] ss:$16 sm:$0x3] %vm38, %v37
    %s40 = scalar_lea.vmem %s0, 29
    %v41 = vld [vmem:[%s40] sm:$0x1]
    %s42 = scalar_lea.vmem %s0, 60
    %v43 = vld [vmem:[%s42] sm:$0x2]
    %vm44 = vcmask 1041409
    %v45 = vsel %vm44, %v43, %v41
    %46 = vrot.lane.b32.xlu0 %v45, 102
    %v47 = vpop.permute.xlu0 %46
    %vm48 = vcmask 917296
    %s49 = scalar_lea.vmem [#allocation0], 8
    %50 = vst.msk [vmem:[%s49] ss:$16 sm:$0x3] %vm48, %v47
    %s51 = scalar_lea.vmem %s0, 12
    %v52 = vld [vmem:[%s51] sm:$0x1]
    %s53 = scalar_lea.vmem %s0, 43
    %v54 = vld [vmem:[%s53] sm:$0x2]
    %vm55 = vcmask 1041409
    %v56 = vsel %vm55, %v54, %v52
    %57 = vrot.lane.b32.xlu0 %v56, 100
    %v58 = vpop.permute.xlu0 %57
    %vm59 = vcmask 900896
    %60 = vst.msk [vmem:[#allocation0] ss:$16 sm:$0x3] %vm59, %v58
    %s61 = scalar_lea.vmem %s0, 28
    %v62 = vld [vmem:[%s61] sm:$0x1]
    %s63 = scalar_lea.vmem %s0, 59
    %v64 = vld [vmem:[%s63] sm:$0x2]
    %vm65 = vcmask 1041409
    %v66 = vsel %vm65, %v64, %v62
    %67 = vrot.lane.b32.xlu0 %v66, 92
    %v68 = vpop.permute.xlu0 %67
    %vm69 = vcmask 835296
    %s70 = scalar_lea.vmem [#allocation0], 8
    %71 = vst.msk [vmem:[%s70] ss:$16 sm:$0x3] %vm69, %v68
    %s72 = scalar_lea.vmem %s0, 11
    %v73 = vld [vmem:[%s72] sm:$0x1]
    %s74 = scalar_lea.vmem %s0, 42
    %v75 = vld [vmem:[%s74] sm:$0x2]
    %vm76 = vcmask 1041409
    %v77 = vsel %vm76, %v75, %v73
    %78 = vrot.lane.b32.xlu0 %v77, 90
    %v79 = vpop.permute.xlu0 %78
    %vm80 = vcmask 818896
    %81 = vst.msk [vmem:[#allocation0] ss:$16 sm:$0x3] %vm80, %v79
    %s82 = scalar_lea.vmem %s0, 27
    %v83 = vld [vmem:[%s82] sm:$0x1]
    %s84 = scalar_lea.vmem %s0, 58
    %v85 = vld [vmem:[%s84] sm:$0x2]
    %vm86 = vcmask 1041409
    %v87 = vsel %vm86, %v85, %v83
    %88 = vrot.lane.b32.xlu0 %v87, 82
    %v89 = vpop.permute.xlu0 %88
    %vm90 = vcmask 753296
    %s91 = scalar_lea.vmem [#allocation0], 8
    %92 = vst.msk [vmem:[%s91] ss:$16 sm:$0x3] %vm90, %v89
    %s93 = scalar_lea.vmem %s0, 10
    %v94 = vld [vmem:[%s93] sm:$0x1]
    %s95 = scalar_lea.vmem %s0, 41
    %v96 = vld [vmem:[%s95] sm:$0x2]
    %vm97 = vcmask 1041409
    %v98 = vsel %vm97, %v96, %v94
    %99 = vrot.lane.b32.xlu0 %v98, 80
    %v100 = vpop.permute.xlu0 %99
    %vm101 = vcmask 736896
    %102 = vst.msk [vmem:[#allocation0] ss:$16 sm:$0x3] %vm101, %v100
    %s103 = scalar_lea.vmem %s0, 26
    %v104 = vld [vmem:[%s103] sm:$0x1]
    %s105 = scalar_lea.vmem %s0, 57
    %v106 = vld [vmem:[%s105] sm:$0x2]
    %vm107 = vcmask 1041409
    %v108 = vsel %vm107, %v106, %v104
    %109 = vrot.lane.b32.xlu0 %v108, 72
    %v110 = vpop.permute.xlu0 %109
    %vm111 = vcmask 671296
    %s112 = scalar_lea.vmem [#allocation0], 8
    %113 = vst.msk [vmem:[%s112] ss:$16 sm:$0x3] %vm111, %v110
    %s114 = scalar_lea.vmem %s0, 9
    %v115 = vld [vmem:[%s114] sm:$0x1]
    %s116 = scalar_lea.vmem %s0, 40
    %v117 = vld [vmem:[%s116] sm:$0x2]
    %vm118 = vcmask 1041409
    %v119 = vsel %vm118, %v117, %v115
    %120 = vrot.lane.b32.xlu0 %v119, 70
    %v121 = vpop.permute.xlu0 %120
    %vm122 = vcmask 654896
    %123 = vst.msk [vmem:[#allocation0] ss:$16 sm:$0x3] %vm122, %v121
    %s124 = scalar_lea.vmem %s0, 25
    %v125 = vld [vmem:[%s124] sm:$0x1]
    %s126 = scalar_lea.vmem %s0, 56
    %v127 = vld [vmem:[%s126] sm:$0x2]
    %vm128 = vcmask 1041409
    %v129 = vsel %vm128, %v127, %v125
    %130 = vrot.lane.b32.xlu0 %v129, 62
    %v131 = vpop.permute.xlu0 %130
    %vm132 = vcmask 589296
    %s133 = scalar_lea.vmem [#allocation0], 8
    %134 = vst.msk [vmem:[%s133] ss:$16 sm:$0x3] %vm132, %v131
    %s135 = scalar_lea.vmem %s0, 8
    %v136 = vld [vmem:[%s135] sm:$0x1]
    %s137 = scalar_lea.vmem %s0, 39
    %v138 = vld [vmem:[%s137] sm:$0x2]
    %vm139 = vcmask 1041409
    %v140 = vsel %vm139, %v138, %v136
    %141 = vrot.lane.b32.xlu0 %v140, 60
    %v142 = vpop.permute.xlu0 %141
    %vm143 = vcmask 572896
    %144 = vst.msk [vmem:[#allocation0] ss:$16 sm:$0x3] %vm143, %v142
    %s145 = scalar_lea.vmem %s0, 24
    %v146 = vld [vmem:[%s145] sm:$0x1]
    %s147 = scalar_lea.vmem %s0, 55
    %v148 = vld [vmem:[%s147] sm:$0x2]
    %vm149 = vcmask 1041409
    %v150 = vsel %vm149, %v148, %v146
    %151 = vrot.lane.b32.xlu0 %v150, 52
    %v152 = vpop.permute.xlu0 %151
    %vm153 = vcmask 507296
    %s154 = scalar_lea.vmem [#allocation0], 8
    %155 = vst.msk [vmem:[%s154] ss:$16 sm:$0x3] %vm153, %v152
    %s156 = scalar_lea.vmem %s0, 5
    %v157 = vld [vmem:[%s156] sm:$0x1]
    %s158 = scalar_lea.vmem %s0, 36
    %v159 = vld [vmem:[%s158] sm:$0x2]
    %vm160 = vcmask 1041409
    %v161 = vsel %vm160, %v159, %v157
    %162 = vrot.lane.b32.xlu0 %v161, 50
    %v163 = vpop.permute.xlu0 %162
    %vm164 = vcmask 490896
    %165 = vst.msk [vmem:[#allocation0] ss:$16 sm:$0x3] %vm164, %v163
    %s166 = scalar_lea.vmem %s0, 21
    %v167 = vld [vmem:[%s166] sm:$0x1]
    %s168 = scalar_lea.vmem %s0, 52
    %v169 = vld [vmem:[%s168] sm:$0x2]
    %vm170 = vcmask 1041409
    %v171 = vsel %vm170, %v169, %v167
    %172 = vrot.lane.b32.xlu0 %v171, 42
    %v173 = vpop.permute.xlu0 %172
    %vm174 = vcmask 425296
    %s175 = scalar_lea.vmem [#allocation0], 8
    %176 = vst.msk [vmem:[%s175] ss:$16 sm:$0x3] %vm174, %v173
    %s177 = scalar_lea.vmem %s0, 4
    %v178 = vld [vmem:[%s177] sm:$0x1]
    %s179 = scalar_lea.vmem %s0, 35
    %v180 = vld [vmem:[%s179] sm:$0x2]
    %vm181 = vcmask 1041409
    %v182 = vsel %vm181, %v180, %v178
    %183 = vrot.lane.b32.xlu0 %v182, 40
    %v184 = vpop.permute.xlu0 %183
    %vm185 = vcmask 408896
    %186 = vst.msk [vmem:[#allocation0] ss:$16 sm:$0x3] %vm185, %v184
    %s187 = scalar_lea.vmem %s0, 20
    %v188 = vld [vmem:[%s187] sm:$0x1]
    %s189 = scalar_lea.vmem %s0, 51
    %v190 = vld [vmem:[%s189] sm:$0x2]
    %vm191 = vcmask 1041409
    %v192 = vsel %vm191, %v190, %v188
    %193 = vrot.lane.b32.xlu0 %v192, 32
    %v194 = vpop.permute.xlu0 %193
    %vm195 = vcmask 343296
    %s196 = scalar_lea.vmem [#allocation0], 8
    %197 = vst.msk [vmem:[%s196] ss:$16 sm:$0x3] %vm195, %v194
    %s198 = scalar_lea.vmem %s0, 3
    %v199 = vld [vmem:[%s198] sm:$0x1]
    %s200 = scalar_lea.vmem %s0, 34
    %v201 = vld [vmem:[%s200] sm:$0x2]
    %vm202 = vcmask 1041409
    %v203 = vsel %vm202, %v201, %v199
    %204 = vrot.lane.b32.xlu0 %v203, 30
    %v205 = vpop.permute.xlu0 %204
    %vm206 = vcmask 326896
    %207 = vst.msk [vmem:[#allocation0] ss:$16 sm:$0x3] %vm206, %v205
    %s208 = scalar_lea.vmem %s0, 19
    %v209 = vld [vmem:[%s208] sm:$0x1]
    %s210 = scalar_lea.vmem %s0, 50
    %v211 = vld [vmem:[%s210] sm:$0x2]
    %vm212 = vcmask 1041409
    %v213 = vsel %vm212, %v211, %v209
    %214 = vrot.lane.b32.xlu0 %v213, 22
    %v215 = vpop.permute.xlu0 %214
    %vm216 = vcmask 261296
    %s217 = scalar_lea.vmem [#allocation0], 8
    %218 = vst.msk [vmem:[%s217] ss:$16 sm:$0x3] %vm216, %v215
    %s219 = scalar_lea.vmem %s0, 2
    %v220 = vld [vmem:[%s219] sm:$0x1]
    %s221 = scalar_lea.vmem %s0, 33
    %v222 = vld [vmem:[%s221] sm:$0x2]
    %vm223 = vcmask 1041409
    %v224 = vsel %vm223, %v222, %v220
    %225 = vrot.lane.b32.xlu0 %v224, 20
    %v226 = vpop.permute.xlu0 %225
    %vm227 = vcmask 244896
    %228 = vst.msk [vmem:[#allocation0] ss:$16 sm:$0x3] %vm227, %v226
    %s229 = scalar_lea.vmem %s0, 18
    %v230 = vld [vmem:[%s229] sm:$0x1]
    %s231 = scalar_lea.vmem %s0, 49
    %v232 = vld [vmem:[%s231] sm:$0x2]
    %vm233 = vcmask 1041409
    %v234 = vsel %vm233, %v232, %v230
    %235 = vrot.lane.b32.xlu0 %v234, 12
    %v236 = vpop.permute.xlu0 %235
    %vm237 = vcmask 179296
    %s238 = scalar_lea.vmem [#allocation0], 8
    %239 = vst.msk [vmem:[%s238] ss:$16 sm:$0x3] %vm237, %v236
    %s240 = scalar_lea.vmem %s0, 1
    %v241 = vld [vmem:[%s240] sm:$0x1]
    %s242 = scalar_lea.vmem %s0, 32
    %v243 = vld [vmem:[%s242] sm:$0x2]
    %vm244 = vcmask 1041409
    %v245 = vsel %vm244, %v243, %v241
    %246 = vrot.lane.b32.xlu0 %v245, 10
    %v247 = vpop.permute.xlu0 %246
    %vm248 = vcmask 162896
    %249 = vst.msk [vmem:[#allocation0] ss:$16 sm:$0x3] %vm248, %v247
    %s250 = scalar_lea.vmem %s0, 17
    %v251 = vld [vmem:[%s250] sm:$0x1]
    %s252 = scalar_lea.vmem %s0, 48
    %v253 = vld [vmem:[%s252] sm:$0x2]
    %vm254 = vcmask 1041409
    %v255 = vsel %vm254, %v253, %v251
    %256 = vrot.lane.b32.xlu0 %v255, 2
    %v257 = vpop.permute.xlu0 %256
    %vm258 = vcmask 97296
    %s259 = scalar_lea.vmem [#allocation0], 8
    %260 = vst.msk [vmem:[%s259] ss:$16 sm:$0x3] %vm258, %v257
    %s262 = sshll.u32 1, 1
    %s263 = ssub.s32 %s262, 1
    %v265 = vld [vmem:[#allocation0] sm:%s263]
    %s266 = sshll.u32 1, 1
    %s267 = ssub.s32 %s266, 1
    %268 = vst [vmem:[%s1] sm:%s267] %v265
    %s269 = scalar_lea.vmem [#allocation0], 8
    %v270 = vld [vmem:[%s269] sm:%s263]
    %s271 = sshll.u32 1, 1
    %s272 = ssub.s32 %s271, 1
    %s273 = scalar_lea.vmem %s1, 1
    %274 = vst [vmem:[%s273] sm:%s272] %v270
    %s275 = scalar_lea.vmem [#allocation0], 16
    %v276 = vld [vmem:[%s275] sm:%s263]
    %s277 = sshll.u32 1, 1
    %s278 = ssub.s32 %s277, 1
    %s279 = smul.addr 1, 2
    %s280 = scalar_lea.vmem %s1, %s279
    %281 = vst [vmem:[%s280] sm:%s278] %v276
    %s282 = scalar_lea.vmem [#allocation0], 24
    %v283 = vld [vmem:[%s282] sm:%s263]
    %s284 = sshll.u32 1, 1
    %s285 = ssub.s32 %s284, 1
    %s286 = smul.addr 1, 3
    %s287 = scalar_lea.vmem %s1, %s286
    %288 = vst [vmem:[%s287] sm:%s285] %v283

// kernel: focal_tversky_loss.1
$region0: #{focal_tversky_loss.1}
  #allocation0 [shape = 'u32[]', space=smem, size = 0x4, offset = 0x4, fixed_abs, tag = 'smem constant byte address 0x4 - core index']
  #allocation1 [shape = 'u32[144,128]{1,0:T(1,128)}', space=vmem, size = 0x12000, scoped, tag = 'internal scratch']
  %s0 = inlined_call_operand.vmem [shape: f32[2,4,240], index: 0, kind: input, shape index: {}]
  %s1 = inlined_call_operand.vmem [shape: s32[2,1,240], index: 1, kind: input, shape index: {}]
  %s2 = inlined_call_operand.vmem [shape: f32[2,3,4,256], index: 2, kind: output, shape index: {}]
  %s3 = sld [smem:[#allocation0]]
  $region45: #{focal_tversky_loss.1} parent=0
    _
  %s5 = ssub.s32 1, %s3
  %s6 = scalar_select 0, %s5, %s3
  loop: start=0, step=1, limit=4
  $region2: #{focal_tversky_loss.1} parent=0 // loop_pre_header
    _
  $region3: #{focal_tversky_loss.1} parent=0 // loop_header
    %s8 = sphi 0, %s12
    %p9 = scmp.ge.s32.totalorder %s8, 4
    %s15 = sphi 0, %s34
    %s16 = sphi 0, %s30
    %s17 = sphi 0, %s26
    %s18 = sphi 0, %s15
    %s19 = sphi 0, %s16
    %s20 = sphi 0, %s17
    %s21 = sphi 0, %s18
    %s22 = sphi 0, %s19
    %s23 = sphi 0, %s20
    %s45 = sphi 0, %s47
    %s48 = sphi 0, %s45
    %s49 = sphi 0, %s48
    %s65 = sphi 0, %s49
    %s79 = sphi 0, %s81
    %s82 = sphi 0, %s79
    %s83 = sphi 0, %s82
    %s99 = sphi 0, %s83
    %s107 = sphi 0, %s109
    %s110 = sphi 0, %s107
    %s111 = sphi 0, %s110
    %s127 = sphi 0, %s111
  $region4: #{focal_tversky_loss.1} parent=0 // loop_header_branch
    %11 = sbr.rel (%p9) target = $region8
  $region5: #{focal_tversky_loss.1} parent=0 // loop_body
    %s13 = ssub.s32 %s8, 1
    %s14 = ssub.s32 %s8, 2
    %s24 = sadd.s32 1, %s17
    %p25 = scmp.ge.s32.totalorder %s24, 1
    %s26 = scalar_select %p25, 0, %s24
    %s27 = sadd.s32 1, %s16
    %s28 = scalar_select %p25, %s27, %s16
    %p29 = scmp.ge.s32.totalorder %s28, 1
    %s30 = scalar_select %p29, 0, %s28
    %s31 = sadd.s32 1, %s15
    %s32 = scalar_select %p29, %s31, %s15
    %p33 = scmp.ge.s32.totalorder %s32, 2
    %s34 = scalar_select %p33, 0, %s32
    %s35 = sadd.s32 %s16, %s17
    %p36 = scmp.lt.s32.totalorder %s35, 0
    %s37 = scalar_select %p36, %s35, 0
    %s38 = sadd.s32 %s30, %s26
    %p39 = scmp.lt.s32.totalorder %s38, 0
    %s40 = scalar_select %p39, %s38, 0
    %s41 = ssub.s32 %s15, %s34
    %s42 = ssub.s32 %s37, %s40
    %s43 = sor.u32 %s41, %s42
    %p44 = scmp.eq.s32.totalorder %s43, 0
    %s46 = sadd.s32 %s45, 1
    %s47 = scalar_select %p44, %s45, %s46
    %p50 = pneg %p44
    %p51 = scmp.eq.s32.totalorder %s8, 1
    %p52 = por %p50, %p51
    %p53 = scmp.ne.s32.totalorder %s45, %s48
    %p54 = scmp.eq.s32.totalorder %s8, 0
    %p55 = por %p53, %p54
    %p56 = scmp.ne.s32.totalorder %s45, %s48
    %p57 = scmp.eq.s32.totalorder %s13, 1
    %p58 = por %p56, %p57
    %p59 = scmp.ne.s32.totalorder %s48, %s49
    %p60 = scmp.eq.s32.totalorder %s13, 0
    %p61 = por %p59, %p60
    %p62 = scmp.ne.s32.totalorder %s48, %s49
    %p63 = scmp.eq.s32.totalorder %s14, 1
    %p64 = por %p62, %p63
    %p66 = scmp.ne.s32.totalorder %s49, %s65
    %p67 = scmp.eq.s32.totalorder %s14, 0
    %p68 = por %p66, %p67
    %s69 = sadd.s32 %s16, %s17
    %p70 = scmp.lt.s32.totalorder %s69, 0
    %s71 = scalar_select %p70, %s69, 0
    %s72 = sadd.s32 %s30, %s26
    %p73 = scmp.lt.s32.totalorder %s72, 0
    %s74 = scalar_select %p73, %s72, 0
    %s75 = ssub.s32 %s15, %s34
    %s76 = ssub.s32 %s71, %s74
    %s77 = sor.u32 %s75, %s76
    %p78 = scmp.eq.s32.totalorder %s77, 0
    %s80 = sadd.s32 %s79, 1
    %s81 = scalar_select %p78, %s79, %s80
    %p84 = pneg %p78
    %p85 = scmp.eq.s32.totalorder %s8, 1
    %p86 = por %p84, %p85
    %p87 = scmp.ne.s32.totalorder %s79, %s82
    %p88 = scmp.eq.s32.totalorder %s8, 0
    %p89 = por %p87, %p88
    %p90 = scmp.ne.s32.totalorder %s79, %s82
    %p91 = scmp.eq.s32.totalorder %s13, 1
    %p92 = por %p90, %p91
    %p93 = scmp.ne.s32.totalorder %s82, %s83
    %p94 = scmp.eq.s32.totalorder %s13, 0
    %p95 = por %p93, %p94
    %p96 = scmp.ne.s32.totalorder %s82, %s83
    %p97 = scmp.eq.s32.totalorder %s14, 1
    %p98 = por %p96, %p97
    %p100 = scmp.ne.s32.totalorder %s83, %s99
    %p101 = scmp.eq.s32.totalorder %s14, 0
    %p102 = por %p100, %p101
    %s103 = sadd.s32 %s15, %s16
    %s104 = sadd.s32 %s34, %s30
    %s105 = ssub.s32 %s103, %s104
    %p106 = scmp.eq.s32.totalorder %s105, 0
    %s108 = sadd.s32 %s107, 1
    %s109 = scalar_select %p106, %s107, %s108
    %p112 = pneg %p106
    %p113 = scmp.eq.s32.totalorder %s8, 1
    %p114 = por %p112, %p113
    %p115 = scmp.ne.s32.totalorder %s107, %s110
    %p116 = scmp.eq.s32.totalorder %s8, 0
    %p117 = por %p115, %p116
    %p118 = scmp.ne.s32.totalorder %s107, %s110
    %p119 = scmp.eq.s32.totalorder %s13, 1
    %p120 = por %p118, %p119
    %p121 = scmp.ne.s32.totalorder %s110, %s111
    %p122 = scmp.eq.s32.totalorder %s13, 0
    %p123 = por %p121, %p122
    %p124 = scmp.ne.s32.totalorder %s110, %s111
    %p125 = scmp.eq.s32.totalorder %s14, 1
    %p126 = por %p124, %p125
    %p128 = scmp.ne.s32.totalorder %s111, %s127
    %p129 = scmp.eq.s32.totalorder %s14, 0
    %p130 = por %p128, %p129
    %p131 = scmp.le.s32.totalorder 1, %s8
    %p132 = scmp.lt.s32.totalorder %s8, 3
    %p133 = pnand %p131, %p132
    %p134 = pneg %p133
    // Predicated region
    $region9: #{focal_tversky_loss.1} parent=5 // pred_check
      _
    $region10: #{focal_tversky_loss.1} parent=5 // pred_check_branch
      %136 = sbr.rel (%p133) target = $region12
    $region11: #{focal_tversky_loss.1} parent=5 // pred_region
      %s137 = ssub.s32 %s8, 1
    $region12: #{focal_tversky_loss.1} parent=5 // pred_fallthru
      _
    %p138 = scmp.lt.s32.totalorder %s8, 2
    // Predicated region
    $region13: #{focal_tversky_loss.1} parent=5 // pred_check
      %p139 = pneg %p138
    $region14: #{focal_tversky_loss.1} parent=5 // pred_check_branch
      %141 = sbr.rel (%p139) target = $region16
    $region15: #{focal_tversky_loss.1} parent=5 // pred_region
      // Predicated region
      $region17: #{focal_tversky_loss.1} parent=15 // pred_check
        %p142 = pneg %p55
      $region18: #{focal_tversky_loss.1} parent=15 // pred_check_branch
        %144 = sbr.rel (%p142) target = $region20
      $region19: #{focal_tversky_loss.1} parent=15 // pred_region
        %s145 = sadd.s32 %s16, %s17
        %p146 = scmp.lt.s32.totalorder %s145, 0
        %s147 = scalar_select %p146, %s145, 0
        %s148 = smul.u32 2, %s147
        %p149 = scmp.lt.s32.totalorder %s15, 1
        %s150 = scalar_select %p149, %s15, 1
        %p151 = scmp.lt.s32.totalorder %s148, 1
        %s152 = scalar_select %p151, %s148, 1
        %s153 = smul.addr %s150, 2
        %s154 = sadd.s32 %s152, %s153
        %s155 = smul.addr %s154, 4
        %s156 = scalar_lea.vmem %s0, %s155
        %s157 = sadd.s32 %s16, %s17
        %p158 = scmp.lt.s32.totalorder %s157, 0
        %s159 = scalar_select %p158, %s157, 0
        %s160 = smul.u32 2, %s159
      $region20: #{focal_tversky_loss.1} parent=15 // pred_fallthru
        _
      // Predicated region
      $region21: #{focal_tversky_loss.1} parent=15 // pred_check
        %p161 = pneg %p89
      $region22: #{focal_tversky_loss.1} parent=15 // pred_check_branch
        %163 = sbr.rel (%p161) target = $region24
      $region23: #{focal_tversky_loss.1} parent=15 // pred_region
        %s164 = sadd.s32 %s16, %s17
        %p165 = scmp.lt.s32.totalorder %s164, 0
        %s166 = scalar_select %p165, %s164, 0
        %s167 = smul.u32 2, %s166
        %p168 = scmp.lt.s32.totalorder %s15, 1
        %s169 = scalar_select %p168, %s15, 1
        %p170 = scmp.lt.s32.totalorder %s167, 1
        %s171 = scalar_select %p170, %s167, 1
        %s172 = smul.addr %s169, 2
        %s173 = sadd.s32 %s171, %s172
        %s174 = scalar_lea.vmem %s1, %s173
        %s175 = sadd.s32 %s16, %s17
        %p176 = scmp.lt.s32.totalorder %s175, 0
        %s177 = scalar_select %p176, %s175, 0
        %s178 = smul.u32 2, %s177
      $region24: #{focal_tversky_loss.1} parent=15 // pred_fallthru
        _
    $region16: #{focal_tversky_loss.1} parent=5 // pred_fallthru
      _
    %p179 = scmp.le.s32.totalorder 1, %s8
    %p180 = scmp.lt.s32.totalorder %s8, 3
    %p181 = pnand %p179, %p180
    %p182 = pneg %p181
    // Predicated region
    $region25: #{focal_tversky_loss.1} parent=5 // pred_check
      _
    $region26: #{focal_tversky_loss.1} parent=5 // pred_check_branch
      %184 = sbr.rel (%p181) target = $region28
    $region27: #{focal_tversky_loss.1} parent=5 // pred_region
      %s185 = ssub.s32 %s8, 1
      %s186 = sadd.s32 %s19, %s20
      %p187 = scmp.lt.s32.totalorder %s186, 0
      %s188 = scalar_select %p187, %s186, 0
      %s189 = smul.u32 2, %s188
      %p190 = scmp.lt.s32.totalorder %s18, 1
      %s191 = scalar_select %p190, %s18, 1
      %p192 = scmp.lt.s32.totalorder %s189, 1
      %s193 = scalar_select %p192, %s189, 1
      %s194 = smul.addr %s191, 2
      %s195 = sadd.s32 %s193, %s194
      %s196 = smul.addr %s195, 4
      %s197 = scalar_lea.vmem %s0, %s196
      %p198 = pneg %p61
      %p199 = pneg %p58
      %s200 = sadd.s32 %s19, %s20
      %p201 = scmp.lt.s32.totalorder %s200, 0
      %s202 = scalar_select %p201, %s200, 0
      %s203 = smul.u32 2, %s202
      %p204 = scmp.lt.s32.totalorder %s18, 1
      %s205 = scalar_select %p204, %s18, 1
      %p206 = scmp.lt.s32.totalorder %s203, 1
      %s207 = scalar_select %p206, %s203, 1
      %s208 = smul.addr %s205, 2
      %s209 = sadd.s32 %s207, %s208
      %s210 = scalar_lea.vmem %s1, %s209
      %p211 = pneg %p95
      %p212 = pneg %p92
      %p213 = pneg %p123
      %p214 = pneg %p120
      %s215 = sadd.s32 %s18, %s19
      %p216 = scmp.lt.s32.totalorder %s215, 1
      %s217 = scalar_select %p216, %s215, 1
      %s218 = smul.addr %s217, 6
      %s219 = smul.addr %s218, 4
      %s220 = scalar_lea.vmem %s2, %s219
      %s221 = sadd.s32 %s19, %s20
      %p222 = scmp.lt.s32.totalorder %s221, 0
      %s223 = scalar_select %p222, %s221, 0
      %s224 = smul.u32 2, %s223
      %p225 = scmp.lt.s32.totalorder %s18, 1
      %s226 = scalar_select %p225, %s18, 1
      %p227 = scmp.lt.s32.totalorder %s224, 1
      %s228 = scalar_select %p227, %s224, 1
      %s229 = smul.addr %s226, 2
      %s230 = sadd.s32 %s228, %s229
      %s231 = smul.addr %s230, 4
      %s232 = scalar_lea.vmem %s0, %s231
      %s233 = sadd.s32 %s19, %s20
      %p234 = scmp.lt.s32.totalorder %s233, 0
      %s235 = scalar_select %p234, %s233, 0
      %s236 = smul.u32 2, %s235
      %s237 = sadd.s32 %s19, %s20
      %p238 = scmp.lt.s32.totalorder %s237, 0
      %s239 = scalar_select %p238, %s237, 0
      %s240 = smul.u32 2, %s239
      %p241 = scmp.lt.s32.totalorder %s18, 1
      %s242 = scalar_select %p241, %s18, 1
      %p243 = scmp.lt.s32.totalorder %s240, 1
      %s244 = scalar_select %p243, %s240, 1
      %s245 = smul.addr %s242, 2
      %s246 = sadd.s32 %s244, %s245
      %s247 = scalar_lea.vmem %s1, %s246
      %s248 = sadd.s32 %s19, %s20
      %p249 = scmp.lt.s32.totalorder %s248, 0
      %s250 = scalar_select %p249, %s248, 0
      %s251 = smul.u32 2, %s250
      %s252 = sadd.s32 %s18, %s19
      %p253 = scmp.lt.s32.totalorder %s252, 1
      %s254 = scalar_select %p253, %s252, 1
      %s255 = smul.addr %s254, 6
      %s256 = smul.addr %s255, 4
      %s257 = scalar_lea.vmem %s2, %s256
      %s258 = sadd.s32 %s18, %s19
      %p259 = scmp.eq.s32.totalorder %s20, 0
      // Predicated region
      $region29: #{focal_tversky_loss.1} parent=27 // pred_check
        %p260 = pneg %p259
      $region30: #{focal_tversky_loss.1} parent=27 // pred_check_branch
        %262 = sbr.rel (%p260) target = $region32
      $region31: #{focal_tversky_loss.1} parent=27 // pred_region
        %263 = vst [vmem:[%s257] sm:$0xff] 0.0
        %264 = vst [vmem:[%s257 + $0x8] sm:$0xff] 0.0
        %265 = vst [vmem:[%s257 + $0x10] sm:$0xff] 0.0
      $region32: #{focal_tversky_loss.1} parent=27 // pred_fallthru
        _
      %v266 = vld [vmem:[%s232] sm:$0xff]
      %v267 = vld [vmem:[%s247] sm:$0x3]
      %s268 = sadd.s32 %s19, %s20
      %v269 = vlaneseq
      %v270 = vand.u32 %v269, 127
      %v271 = vadd.s32 %v270, 128
      %s272 = smul.u32 %s268, 256
      %v273 = vstv %s272
      %v274 = vadd.s32 %v273, %v270
      %v275 = vadd.s32 %v273, %v271
      %vm276 = vcmp.lt.s32.totalorder %v274, 240
      %vm277 = vcmp.lt.s32.totalorder %v275, 240
      %v278 = vsel %vm276, 1, 0
      %v279 = vsel %vm277, 1, 0
      %vm280 = vcmp.eq.s32.totalorder %v278, 1
      %vm281 = vcmp.eq.s32.totalorder %v279, 1
      %v283 = vcombine.high %v266, %v266
      %v285 = vsel %vm280, %v266, 0.0
      %v286 = vsel %vm281, %v283, 0.0
      %vm287 = vcmask 1043456
      %v288 = vsel %vm287, %v285, -inf
      %v289 = vrot.slane %v288, 4
      %v290 = vmax.f32 %v288, %v289
      %v291 = vrot.slane %v290, 2
      %v292 = vmax.f32 %v290, %v291
      %v293 = vrot.slane %v292, 1
      %v294 = vmax.f32 %v292, %v293
      %v295 = vsel %vm287, %v286, -inf
      %v296 = vrot.slane %v295, 4
      %v297 = vmax.f32 %v295, %v296
      %v298 = vrot.slane %v297, 2
      %v299 = vmax.f32 %v297, %v298
      %v300 = vrot.slane %v299, 1
      %v301 = vmax.f32 %v299, %v300
      %v302 = vsub.f32 %v285, %v294
      %v303 = vsub.f32 %v286, %v301
      %v304 = vmul.f32 %v302, 1.442695
      %v305 = vpow.pop %v304
      %v306 = vmul.f32 %v303, 1.442695
      %v307 = vpow.pop %v306
      %v308 = vsel %vm287, %v305, 0.0
      %v309 = vrot.slane %v308, 4
      %v310 = vadd.f32 %v308, %v309
      %v311 = vrot.slane %v310, 2
      %v312 = vadd.f32 %v310, %v311
      %v313 = vrot.slane %v312, 1
      %v314 = vadd.f32 %v312, %v313
      %v315 = vsel %vm287, %v307, 0.0
      %v316 = vrot.slane %v315, 4
      %v317 = vadd.f32 %v315, %v316
      %v318 = vrot.slane %v317, 2
      %v319 = vadd.f32 %v317, %v318
      %v320 = vrot.slane %v319, 1
      %v321 = vadd.f32 %v319, %v320
      %v322 = vrcp.pop %v314
      %v323 = vrcp.pop %v321
      %v324 = vmul.f32 %v305, %v322
      %v325 = vmul.f32 %v307, %v323
      %v326 = vlaneseq
      %v327 = vshrl.u32 %v326, 7
      %v328 = vlaneseq
      %v329 = vshrl.u32 %v328, 7
      %v330 = vsub.s32 0, %v329
      %v331 = vrot.slane %v267, %v330
      %v332 = vlaneseq
      %v333 = vshrl.u32 %v332, 7
      %v334 = vsub.s32 1, %v333
      %v335 = vrot.slane %v267, %v334
      %vm336 = vcmp.eq.s32.totalorder %v327, %v331
      %vm337 = vcmp.eq.s32.totalorder %v327, %v335
      %v338 = vcvt.s32.f32 %v278
      %v339 = vcvt.s32.f32 %v279
      %v340 = vmul.f32 %v324, %v338
      %v341 = vmul.f32 %v325, %v339
      %v342 = vsel %vm336, %v338, 0.0
      %v343 = vsel %vm337, %v339, 0.0
      %v344 = vmul.f32 %v340, %v342
      %v345 = vmul.f32 %v341, %v343
      %v346 = vld [vmem:[%s257] sm:$0xff]
      %v349 = vcombine.low %v344, %v345
      %v351 = vadd.f32 %v346, %v349
      %352 = vst [vmem:[%s257] sm:$0xff] %v351
      %s353 = scalar_lea.vmem %s257, 8
      %v354 = vld [vmem:[%s353] sm:$0xff]
      %v357 = vcombine.low %v340, %v341
      %v359 = vadd.f32 %v354, %v357
      %360 = vst [vmem:[%s353] sm:$0xff] %v359
      %s361 = scalar_lea.vmem %s257, 16
      %v362 = vld [vmem:[%s361] sm:$0xff]
      %v365 = vcombine.low %v342, %v343
      %v367 = vadd.f32 %v362, %v365
      %368 = vst [vmem:[%s361] sm:$0xff] %v367
      %s369 = sadd.s32 %s18, %s19
      %p370 = scmp.lt.s32.totalorder %s369, 1
      %s371 = scalar_select %p370, %s369, 1
      %s372 = smul.addr %s371, 6
      %s373 = smul.addr %s372, 4
      %s374 = scalar_lea.vmem %s2, %s373
      // Predicated region
      $region33: #{focal_tversky_loss.1} parent=27 // pred_check
        %p375 = pneg %p120
      $region34: #{focal_tversky_loss.1} parent=27 // pred_check_branch
        %377 = sbr.rel (%p375) target = $region36
      $region35: #{focal_tversky_loss.1} parent=27 // pred_region
        %s378 = sadd.s32 %s18, %s19
      $region36: #{focal_tversky_loss.1} parent=27 // pred_fallthru
        _
    $region28: #{focal_tversky_loss.1} parent=5 // pred_fallthru
      _
    %p379 = scmp.le.s32.totalorder 2, %s8
    // Predicated region
    $region37: #{focal_tversky_loss.1} parent=5 // pred_check
      %p380 = pneg %p379
    $region38: #{focal_tversky_loss.1} parent=5 // pred_check_branch
      %382 = sbr.rel (%p380) target = $region40
    $region39: #{focal_tversky_loss.1} parent=5 // pred_region
      %s383 = ssub.s32 %s8, 2
      // Predicated region
      $region41: #{focal_tversky_loss.1} parent=39 // pred_check
        %p384 = pneg %p126
      $region42: #{focal_tversky_loss.1} parent=39 // pred_check_branch
        %386 = sbr.rel (%p384) target = $region44
      $region43: #{focal_tversky_loss.1} parent=39 // pred_region
        %s387 = sadd.s32 %s21, %s22
        %p388 = scmp.lt.s32.totalorder %s387, 1
        %s389 = scalar_select %p388, %s387, 1
        %s390 = smul.addr %s389, 6
        %s391 = smul.addr %s390, 4
        %s392 = scalar_lea.vmem %s2, %s391
      $region44: #{focal_tversky_loss.1} parent=39 // pred_fallthru
        _
    $region40: #{focal_tversky_loss.1} parent=5 // pred_fallthru
      _
  $region6: #{focal_tversky_loss.1} parent=0 // loop_footer
    %s12 = sadd.s32 1, %s8
  $region7: #{focal_tversky_loss.1} parent=0 // loop_footer_branch
    %7 = sbr.rel target = $region3
  $region8: #{focal_tversky_loss.1} parent=0 // loop_exit
    _

</llo_original>
